<compile_context>
chip_gen: v5e
topology: v5e:2x2
jax: 0.10.0
libtpu: 0.0.40
codegen_flags: <defaults>
</compile_context>

<pallas_src>
import functools

import jax
import jax.numpy as jnp
from jax import lax
from jax.experimental import pallas as pl
from jax.experimental.pallas import tpu as pltpu


# ----------------------------------------------------------------------------
# Kernel bodies
# ----------------------------------------------------------------------------
def _exp_and_store(arg, o_ref, scale_sq, exp_dtype):
    # arg is already clamped <= 0.
    if exp_dtype == jnp.float32:
        e = jnp.exp(arg)
    else:
        # Opt-in bf16 EUP path (v6e/v7x); never enabled by default.
        e = jnp.exp(arg.astype(exp_dtype)).astype(jnp.float32)
    o_ref[...] = (scale_sq * e).astype(o_ref.dtype)


def _tile_arg(x, y, neg_c, two_c, mxu_dtype):
    """arg = 2c * x.y^T - c*||x||^2 - c*||y||^2 for one (TN,D)x(TM,D) tile."""
    D = x.shape[-1]
    xm = x.astype(mxu_dtype) if mxu_dtype != x.dtype else x
    ym = y.astype(mxu_dtype) if mxu_dtype != y.dtype else y
    # Cross term on the MXU, contracting over D of both operands (no y.T).
    xy = lax.dot_general(
        xm, ym,
        dimension_numbers=(((1,), (1,)), ((), ())),
        preferred_element_type=jnp.float32)              # (TN, TM)
    # ||x||^2 as a sublane-oriented column (broadcasts over columns directly).
    xx_col = jnp.sum(x * x, axis=-1, keepdims=True)      # (TN, 1)
    # ||y||^2 directly as a lane-oriented row via a ones-vector matmul
    # (avoids a per-tile XLU transpose of a (TM, 1) column).
    yy_row = lax.dot_general(
        jnp.ones((1, D), jnp.float32), y * y,
        dimension_numbers=(((1,), (1,)), ((), ())),
        preferred_element_type=jnp.float32)              # (1, TM)
    return two_c * xy + neg_c * xx_col + neg_c * yy_row


def _rbf_kernel(x_ref, y_ref, o_ref, *, neg_c, two_c, scale_sq,
                exp_dtype, mxu_dtype):
    # x_ref: (TN, D), y_ref: (TM, D), o_ref: (TN, TM)  -- batch dim squeezed.
    arg = _tile_arg(x_ref[...], y_ref[...], neg_c, two_c, mxu_dtype)
    arg = jnp.minimum(arg, 0.0)       # d2 >= 0 => exponent <= 0
    _exp_and_store(arg, o_ref, scale_sq, exp_dtype)


def _rbf_kernel_ktiled(x_ref, y_ref, o_ref, acc_ref, *, neg_c, two_c, scale_sq,
                       exp_dtype, mxu_dtype):
    # Same as above but D is tiled: accumulate the exponent over D-chunks in a
    # VMEM f32 scratch, finalize (clamp/exp/scale/store) on the last chunk.
    k = pl.program_id(3)
    partial = _tile_arg(x_ref[...], y_ref[...], neg_c, two_c, mxu_dtype)

    @pl.when(k == 0)
    def _():
        acc_ref[...] = partial

    @pl.when(k != 0)
    def _():
        acc_ref[...] = acc_ref[...] + partial

    @pl.when(k == pl.num_programs(3) - 1)
    def _():
        arg = jnp.minimum(acc_ref[...], 0.0)
        _exp_and_store(arg, o_ref, scale_sq, exp_dtype)


# ----------------------------------------------------------------------------
# Tiling heuristics
# ----------------------------------------------------------------------------
def _vmem_capacity_bytes():
    try:
        info = pltpu.get_tpu_info()
        cap = getattr(info, "vmem_capacity_bytes", None)
        if cap:
            return int(cap)
    except Exception:
        pass
    return 64 << 20  # conservative fallback (v7x per-core VMEM)


def _vmem_footprint(tn, tm, td, out_itemsize, ktiled):
    inputs = 2 * 4 * td * (tn + tm)            # double-buffered f32 x/y tiles
    outputs = 2 * out_itemsize * tn * tm       # double-buffered output tile
    scratch = (4 * tn * tm) if ktiled else 0   # f32 accumulator
    temps = 3 * 4 * tn * tm                    # xy / partial / arg temporaries
    return inputs + outputs + scratch + temps


def _auto_tiles(N, M, D, vmem_cap, out_itemsize):
    # 1024-tiles on 128-MiB parts (v5e/v6e), 512-tiles on 64-MiB v7x.
    cap_tile = 1024 if vmem_cap >= (96 << 20) else 512
    tn = N if N <= cap_tile else cap_tile
    tm = M if M <= cap_tile else cap_tile
    budget = int(0.55 * vmem_cap)   # headroom for compiler scratch / spills

    # Prefer tiling the contraction dim before shrinking TN/TM (keeps the
    # output stores big and the MXU well fed).  Only exact 128-multiple
    # divisors of D are used so input blocks never carry padded garbage.
    td = D
    if _vmem_footprint(tn, tm, td, out_itemsize, False) > budget and D % 128 == 0:
        for cand in (2048, 1024, 512, 256, 128):
            if cand < D and D % cand == 0:
                td = cand
                if _vmem_footprint(tn, tm, td, out_itemsize, True) <= budget:
                    break

    while (_vmem_footprint(tn, tm, td, out_itemsize, td < D) > budget
           and (tn > 256 or tm > 256)):
        if tn >= tm and tn > 256:
            tn = max(256, ((tn // 2 + 7) // 8) * 8)
        elif tm > 256:
            tm = max(256, ((tm // 2 + 127) // 128) * 128)
        else:
            break
    return tn, tm, td


# ----------------------------------------------------------------------------
# Public entry point
# ----------------------------------------------------------------------------
def rbf(x, y, length=1.0, scale=1.0, *, tile_n=None, tile_m=None, tile_d=None,
        out_dtype=jnp.float32, exp_dtype=jnp.float32, mxu_dtype=None,
        ensure_two_cores=True):
    """RBF kernel matrix. x: (B, N, D), y: (B, M, D) -> (B, N, M).

    Opt-in perf knobs (defaults keep exact-f32 semantics):
      out_dtype=jnp.bfloat16   halve the output write (good on v5e HBM BW)
      exp_dtype=jnp.bfloat16   bf16 EUP exp (v6e/v7x only; NOT on v5e)
      mxu_dtype=jnp.bfloat16   bf16 cross-term matmul (useful when D >= ~512)
    """
    x = jnp.asarray(x, jnp.float32)
    y = jnp.asarray(y, jnp.float32)
    B, N, D = x.shape
    By, M, Dy = y.shape
    assert B == By and D == Dy, "batch / feature dims must match"

    out_itemsize = jnp.dtype(out_dtype).itemsize
    vmem_cap = _vmem_capacity_bytes()
    a_tn, a_tm, a_td = _auto_tiles(N, M, D, vmem_cap, out_itemsize)

    TN = a_tn if tile_n is None else min(int(tile_n), N)
    TM = a_tm if tile_m is None else min(int(tile_m), M)
    TD = a_td if tile_d is None else min(int(tile_d), D)
    if TN < N:
        assert TN % 8 == 0, "tile_n must be a multiple of 8 (or >= N)"
    if TM < M:
        assert TM % 128 == 0, "tile_m must be a multiple of 128 (or >= M)"
    if TD < D:
        assert TD % 128 == 0 and D % TD == 0, \
            "tile_d must be a 128-multiple divisor of D (or >= D)"

    nN = pl.cdiv(N, TN)
    nM = pl.cdiv(M, TM)
    nK = (D // TD) if TD < D else 1
    ktiled = nK > 1

    # v7x has 2 TensorCores that shard the parallel grid axes: avoid a
    # degenerate single-point parallel grid when B == 1 (harmless elsewhere).
    if ensure_two_cores and B * nN * nM < 2:
        if tile_n is None and N >= 16:
            TN = ((N // 2 + 7) // 8) * 8
            nN = pl.cdiv(N, TN)
        elif tile_m is None and M >= 256:
            TM = ((M // 2 + 127) // 128) * 128
            nM = pl.cdiv(M, TM)

    c = 1.0 / (2.0 * float(length) ** 2 * D)
    scale_sq = float(scale) ** 2
    mxu = jnp.float32 if mxu_dtype is None else mxu_dtype

    # Advisory cost: y is re-fetched nN times, x nM times per batch.
    cost = pl.CostEstimate(
        flops=int(2 * B * N * M * D),
        transcendentals=int(B * N * M),
        bytes_accessed=int(4 * B * (N * D * nM + M * D * nN)
                           + out_itemsize * B * N * M),
    )

    footprint = _vmem_footprint(TN, TM, TD, out_itemsize, ktiled)
    vmem_limit = min(int(0.9 * vmem_cap), max(32 << 20, 2 * footprint))

    out_shape = jax.ShapeDtypeStruct((B, N, M), out_dtype)

    if not ktiled:
        kernel = functools.partial(
            _rbf_kernel, neg_c=-c, two_c=2.0 * c, scale_sq=scale_sq,
            exp_dtype=exp_dtype, mxu_dtype=mxu)
        return pl.pallas_call(
            kernel,
            out_shape=out_shape,
            grid_spec=pltpu.PrefetchScalarGridSpec(
                num_scalar_prefetch=0,
                grid=(B, nN, nM),
                in_specs=[
                    pl.BlockSpec((pl.Squeezed(), TN, D), lambda b, i, j: (b, i, 0)),
                    pl.BlockSpec((pl.Squeezed(), TM, D), lambda b, i, j: (b, j, 0)),
                ],
                out_specs=pl.BlockSpec((pl.Squeezed(), TN, TM),
                                       lambda b, i, j: (b, i, j)),
            ),
            compiler_params=pltpu.CompilerParams(
                dimension_semantics=("parallel", "parallel", "parallel"),
                vmem_limit_bytes=vmem_limit),
            cost_estimate=cost,
        )(x, y)

    # D-tiled path: innermost "arbitrary" contraction axis + VMEM accumulator.
    kernel = functools.partial(
        _rbf_kernel_ktiled, neg_c=-c, two_c=2.0 * c, scale_sq=scale_sq,
        exp_dtype=exp_dtype, mxu_dtype=mxu)
    return pl.pallas_call(
        kernel,
        out_shape=out_shape,
        grid_spec=pltpu.PrefetchScalarGridSpec(
            num_scalar_prefetch=0,
            grid=(B, nN, nM, nK),
            in_specs=[
                pl.BlockSpec((pl.Squeezed(), TN, TD), lambda b, i, j, k: (b, i, k)),
                pl.BlockSpec((pl.Squeezed(), TM, TD), lambda b, i, j, k: (b, j, k)),
            ],
            out_specs=pl.BlockSpec((pl.Squeezed(), TN, TM),
                                   lambda b, i, j, k: (b, i, j)),
            scratch_shapes=[pltpu.VMEM((TN, TM), jnp.float32)],
        ),
        compiler_params=pltpu.CompilerParams(
            dimension_semantics=("parallel", "parallel", "parallel", "arbitrary"),
            vmem_limit_bytes=vmem_limit),
        cost_estimate=cost,
    )(x, y)


def rbf_reference(x, y, length=1.0, scale=1.0):
    # Pure-JAX reference matching torch.cdist(...)**2 semantics.
    D = x.shape[-1]
    diff = x[:, :, None, :] - y[:, None, :, :]
    d2 = jnp.sum(diff * diff, axis=-1)
    return scale ** 2 * jnp.exp(-d2 / (2.0 * length ** 2 * D))


if __name__ == "__main__":
    # Deterministic parameter init (RBF.__init__ defaults: length=1.0,
    # scale=1.0, non-trainable scalars).
    length = 1.0
    scale = 1.0

    key = jax.random.PRNGKey(0)

    # --- small-shape test (module-consistent sizes) ---
    kx, ky = jax.random.split(key)
    B, N, M, D = 2, 8, 8, 32
    x = jax.random.normal(kx, (B, N, D), dtype=jnp.float32)
    y = jax.random.normal(ky, (B, M, D), dtype=jnp.float32)

    out = jax.block_until_ready(rbf(x, y, length=length, scale=scale))
    ref = rbf_reference(x, y, length=length, scale=scale)
    assert out.shape == (B, N, M)
    assert jnp.allclose(out, ref, atol=1e-5, rtol=1e-5), "mismatch (small)"

    # --- tiled N/M path (explicit small tiles to exercise the grid) ---
    kx2, ky2 = jax.random.split(jax.random.PRNGKey(1))
    B2, N2, M2, D2 = 2, 256, 256, 32
    x2 = jax.random.normal(kx2, (B2, N2, D2), dtype=jnp.float32)
    y2 = jax.random.normal(ky2, (B2, M2, D2), dtype=jnp.float32)

    out2 = jax.block_until_ready(
        rbf(x2, y2, length=length, scale=scale, tile_n=128, tile_m=128))
    ref2 = rbf_reference(x2, y2, length=length, scale=scale)
    assert out2.shape == (B2, N2, M2)
    assert jnp.allclose(out2, ref2, atol=1e-4, rtol=1e-4), "mismatch (tiled)"

    # --- D-tiled (contraction) path + B==1 two-core grid split ---
    kx3, ky3 = jax.random.split(jax.random.PRNGKey(2))
    B3, N3, M3, D3 = 1, 64, 128, 256
    x3 = jax.random.normal(kx3, (B3, N3, D3), dtype=jnp.float32)
    y3 = jax.random.normal(ky3, (B3, M3, D3), dtype=jnp.float32)

    out3 = jax.block_until_ready(
        rbf(x3, y3, length=length, scale=scale, tile_d=128))
    ref3 = rbf_reference(x3, y3, length=length, scale=scale)
    assert out3.shape == (B3, N3, M3)
    assert jnp.allclose(out3, ref3, atol=1e-4, rtol=1e-4), "mismatch (k-tiled)"

    print("KERNEL_OK")
</pallas_src>

<mosaic_0001>
module attributes {stable_mosaic.version = 11 : i64} {
  func.func @_rbf_kernel(%arg0: i32, %arg1: i32, %arg2: i32, %arg3: memref<1x8x32xf32, #tpu.memory_space<vmem>>, %arg4: memref<1x8x32xf32, #tpu.memory_space<vmem>>, %arg5: memref<1x8x8xf32, #tpu.memory_space<vmem>>) attributes {dimension_semantics = [#tpu.dimension_semantics<parallel>, #tpu.dimension_semantics<parallel>, #tpu.dimension_semantics<parallel>], iteration_bounds = array<i64: 2, 1, 1>, scalar_prefetch = 0 : i64, scratch_operands = 0 : i64, tpu.core_type = #tpu.core_type<tc>, window_params = [{transform_indices = @transform_0, window_bounds = array<i64: 1, 8, 32>}, {transform_indices = @transform_1, window_bounds = array<i64: 1, 8, 32>}, {transform_indices = @transform_2, window_bounds = array<i64: 1, 8, 8>}]} {
    %c0 = arith.constant 0 : index
    %c0_0 = arith.constant 0 : index
    %c0_1 = arith.constant 0 : index
    %0 = vector.load %arg3[%c0, %c0_0, %c0_1] : memref<1x8x32xf32, #tpu.memory_space<vmem>>, vector<1x8x32xf32>
    %1 = vector.shape_cast %0 : vector<1x8x32xf32> to vector<8x32xf32>
    %c0_2 = arith.constant 0 : index
    %c0_3 = arith.constant 0 : index
    %c0_4 = arith.constant 0 : index
    %2 = vector.load %arg4[%c0_2, %c0_3, %c0_4] : memref<1x8x32xf32, #tpu.memory_space<vmem>>, vector<1x8x32xf32>
    %3 = vector.shape_cast %2 : vector<1x8x32xf32> to vector<8x32xf32>
    %cst = arith.constant dense<0.000000e+00> : vector<8x8xf32>
    %4 = tpu.matmul %1, %3, %cst {dimension_numbers = #tpu.dot_dimension_numbers<[1], [1], [0], [0], [0, 0, 1, 0], [], []>} : vector<8x32xf32>, vector<8x32xf32>, vector<8x8xf32> -> vector<8x8xf32>
    %5 = arith.mulf %1, %1 : vector<8x32xf32>
    %cst_5 = arith.constant dense<0.000000e+00> : vector<8xf32>
    %6 = vector.multi_reduction <add>, %5, %cst_5 [1] : vector<8x32xf32> to vector<8xf32>
    %7 = vector.shape_cast %6 : vector<8xf32> to vector<8x1xf32>
    %cst_6 = arith.constant 1.000000e+00 : f32
    %8 = vector.broadcast %cst_6 : f32 to vector<1x32xf32>
    %9 = arith.mulf %3, %3 : vector<8x32xf32>
    %cst_7 = arith.constant dense<0.000000e+00> : vector<1x8xf32>
    %10 = tpu.matmul %8, %9, %cst_7 {dimension_numbers = #tpu.dot_dimension_numbers<[1], [1], [0], [0], [0, 0, 1, 0], [], []>} : vector<1x32xf32>, vector<8x32xf32>, vector<1x8xf32> -> vector<1x8xf32>
    %cst_8 = arith.constant 3.125000e-02 : f32
    %11 = vector.broadcast %cst_8 : f32 to vector<8x8xf32>
    %12 = arith.mulf %11, %4 : vector<8x8xf32>
    %cst_9 = arith.constant -1.562500e-02 : f32
    %13 = vector.broadcast %cst_9 : f32 to vector<8x1xf32>
    %14 = arith.mulf %13, %7 : vector<8x1xf32>
    %15 = vector.broadcast %14 : vector<8x1xf32> to vector<8x8xf32>
    %16 = arith.addf %12, %15 : vector<8x8xf32>
    %cst_10 = arith.constant -1.562500e-02 : f32
    %17 = vector.broadcast %cst_10 : f32 to vector<1x8xf32>
    %18 = arith.mulf %17, %10 : vector<1x8xf32>
    %19 = vector.broadcast %18 : vector<1x8xf32> to vector<8x8xf32>
    %20 = arith.addf %16, %19 : vector<8x8xf32>
    %cst_11 = arith.constant 0.000000e+00 : f32
    %21 = vector.broadcast %cst_11 : f32 to vector<8x8xf32>
    %22 = arith.minimumf %20, %21 : vector<8x8xf32>
    %23 = math.exp %22 : vector<8x8xf32>
    %cst_12 = arith.constant 1.000000e+00 : f32
    %24 = vector.broadcast %cst_12 : f32 to vector<8x8xf32>
    %25 = arith.mulf %24, %23 : vector<8x8xf32>
    %c0_13 = arith.constant 0 : index
    %c0_14 = arith.constant 0 : index
    %c0_15 = arith.constant 0 : index
    %26 = vector.load %arg5[%c0_13, %c0_14, %c0_15] : memref<1x8x8xf32, #tpu.memory_space<vmem>>, vector<1x8x8xf32>
    %27 = vector.shape_cast %26 : vector<1x8x8xf32> to vector<8x8xf32>
    %28 = vector.shape_cast %25 : vector<8x8xf32> to vector<1x8x8xf32>
    tpu.vector_store %arg5[%c0_13, %c0_14, %c0_15], %28 {strides = array<i32>} : memref<1x8x8xf32, #tpu.memory_space<vmem>>, vector<1x8x8xf32>,
    return
  }
  func.func @transform_0(%arg0: i32, %arg1: i32, %arg2: i32) -> (i32, i32, i32) {
    %c0_i32 = arith.constant 0 : i32
    %c0_i32_0 = arith.constant 0 : i32
    return %arg0, %arg1, %c0_i32 : i32, i32, i32
  }
  func.func @transform_1(%arg0: i32, %arg1: i32, %arg2: i32) -> (i32, i32, i32) {
    %c0_i32 = arith.constant 0 : i32
    %c0_i32_0 = arith.constant 0 : i32
    return %arg0, %arg2, %c0_i32 : i32, i32, i32
  }
  func.func @transform_2(%arg0: i32, %arg1: i32, %arg2: i32) -> (i32, i32, i32) {
    %c0_i32 = arith.constant 0 : i32
    return %arg0, %arg1, %arg2 : i32, i32, i32
  }
}

</mosaic_0001>

<llo_original>
// kernel: tpu_custom_call.1
$region0: #{tpu_custom_call.1}
  #allocation0 [shape = 'u32[]', space=smem, size = 0x4, offset = 0x4, fixed_abs, tag = 'smem constant byte address 0x4 - core index']
  #allocation1 [shape = 'u32[72,128]{1,0:T(1,128)}', space=vmem, size = 0x9000, scoped, tag = 'internal scratch']
  %s0 = inlined_call_operand.hbm [shape: f32[2,8,32], index: 0, kind: input, shape index: {}]
  %s1 = inlined_call_operand.hbm [shape: f32[2,8,32], index: 1, kind: input, shape index: {}]
  %s2 = inlined_call_operand.hbm [shape: f32[2,8,8], index: 2, kind: output, shape index: {}]
  %s3 = sld [smem:[#allocation0]]
  $region49: #{tpu_custom_call.1} parent=0
    _
  %s5 = ssub.s32 1, %s3
  %s6 = scalar_select 0, %s5, %s3
  $region1: #{tpu_custom_call.1} parent=0
    #allocation2 [shape = 'u8[8192]{0}', space=vmem, size = 0x2000, scoped, tag = 'input window, operand 0']
    #allocation3 [shape = 's32[2]{0}', space=sflag, size = 0x8, scoped, tag = 'scoped memory for tpu_custom_call.1']
    #allocation4 [shape = 's32[2]{0}', space=sflag, size = 0x8, scoped, tag = 'scoped memory for tpu_custom_call.1']
    #allocation5 [shape = 'u8[8192]{0}', space=vmem, size = 0x2000, scoped, tag = 'input window, operand 1']
    #allocation6 [shape = 's32[2]{0}', space=sflag, size = 0x8, scoped, tag = 'scoped memory for tpu_custom_call.1']
    #allocation7 [shape = 'u8[8192]{0}', space=vmem, size = 0x2000, scoped, tag = 'output window, operand 0']
    %7 = vsyncpa [#allocation3], 0
    %s8 = scalar_lea.sflag [#allocation3], 1
    %9 = vsyncpa %s8, 0
    %10 = vsyncpa [#allocation6], 0
    %s11 = scalar_lea.sflag [#allocation6], 1
    %12 = vsyncpa %s11, 0
    %13 = vsyncpa [#allocation4], 0
    %s14 = scalar_lea.sflag [#allocation4], 1
    %15 = vsyncpa %s14, 0
    loop: start=0, step=1, limit=4
    $region2: #{tpu_custom_call.1} parent=1 // loop_pre_header
      _
    $region3: #{tpu_custom_call.1} parent=1 // loop_header
      %s17 = sphi 0, %s21
      %p18 = scmp.ge.s32.totalorder %s17, 4
      %s24 = sphi 0, %s43
      %s25 = sphi 0, %s39
      %s26 = sphi 0, %s35
      %s27 = sphi 0, %s24
      %s28 = sphi 0, %s25
      %s29 = sphi 0, %s26
      %s30 = sphi 0, %s27
      %s31 = sphi 0, %s28
      %s32 = sphi 0, %s29
      %s48 = sphi 0, %s50
      %s51 = sphi 0, %s48
      %s52 = sphi 0, %s51
      %s68 = sphi 0, %s52
      %s76 = sphi 0, %s78
      %s79 = sphi 0, %s76
      %s80 = sphi 0, %s79
      %s96 = sphi 0, %s80
      %s106 = sphi 0, %s108
      %s109 = sphi 0, %s106
      %s110 = sphi 0, %s109
      %s126 = sphi 0, %s110
    $region4: #{tpu_custom_call.1} parent=1 // loop_header_branch
      %20 = sbr.rel (%p18) target = $region8
    $region5: #{tpu_custom_call.1} parent=1 // loop_body
      %s22 = ssub.s32 %s17, 1
      %s23 = ssub.s32 %s17, 2
      %s33 = sadd.s32 1, %s26
      %p34 = scmp.ge.s32.totalorder %s33, 1
      %s35 = scalar_select %p34, 0, %s33
      %s36 = sadd.s32 1, %s25
      %s37 = scalar_select %p34, %s36, %s25
      %p38 = scmp.ge.s32.totalorder %s37, 1
      %s39 = scalar_select %p38, 0, %s37
      %s40 = sadd.s32 1, %s24
      %s41 = scalar_select %p38, %s40, %s24
      %p42 = scmp.ge.s32.totalorder %s41, 2
      %s43 = scalar_select %p42, 0, %s41
      %s44 = ssub.s32 %s24, %s43
      %s45 = ssub.s32 %s25, %s39
      %s46 = sor.u32 %s44, %s45
      %p47 = scmp.eq.s32.totalorder %s46, 0
      %s49 = sadd.s32 %s48, 1
      %s50 = scalar_select %p47, %s48, %s49
      %p53 = pneg %p47
      %p54 = scmp.eq.s32.totalorder %s17, 1
      %p55 = por %p53, %p54
      %p56 = scmp.ne.s32.totalorder %s48, %s51
      %p57 = scmp.eq.s32.totalorder %s17, 0
      %p58 = por %p56, %p57
      %p59 = scmp.ne.s32.totalorder %s48, %s51
      %p60 = scmp.eq.s32.totalorder %s22, 1
      %p61 = por %p59, %p60
      %p62 = scmp.ne.s32.totalorder %s51, %s52
      %p63 = scmp.eq.s32.totalorder %s22, 0
      %p64 = por %p62, %p63
      %p65 = scmp.ne.s32.totalorder %s51, %s52
      %p66 = scmp.eq.s32.totalorder %s23, 1
      %p67 = por %p65, %p66
      %p69 = scmp.ne.s32.totalorder %s52, %s68
      %p70 = scmp.eq.s32.totalorder %s23, 0
      %p71 = por %p69, %p70
      %s72 = ssub.s32 %s24, %s43
      %s73 = ssub.s32 %s26, %s35
      %s74 = sor.u32 %s72, %s73
      %p75 = scmp.eq.s32.totalorder %s74, 0
      %s77 = sadd.s32 %s76, 1
      %s78 = scalar_select %p75, %s76, %s77
      %p81 = pneg %p75
      %p82 = scmp.eq.s32.totalorder %s17, 1
      %p83 = por %p81, %p82
      %p84 = scmp.ne.s32.totalorder %s76, %s79
      %p85 = scmp.eq.s32.totalorder %s17, 0
      %p86 = por %p84, %p85
      %p87 = scmp.ne.s32.totalorder %s76, %s79
      %p88 = scmp.eq.s32.totalorder %s22, 1
      %p89 = por %p87, %p88
      %p90 = scmp.ne.s32.totalorder %s79, %s80
      %p91 = scmp.eq.s32.totalorder %s22, 0
      %p92 = por %p90, %p91
      %p93 = scmp.ne.s32.totalorder %s79, %s80
      %p94 = scmp.eq.s32.totalorder %s23, 1
      %p95 = por %p93, %p94
      %p97 = scmp.ne.s32.totalorder %s80, %s96
      %p98 = scmp.eq.s32.totalorder %s23, 0
      %p99 = por %p97, %p98
      %s100 = ssub.s32 %s24, %s43
      %s101 = ssub.s32 %s25, %s39
      %s102 = sor.u32 %s100, %s101
      %s103 = ssub.s32 %s26, %s35
      %s104 = sor.u32 %s102, %s103
      %p105 = scmp.eq.s32.totalorder %s104, 0
      %s107 = sadd.s32 %s106, 1
      %s108 = scalar_select %p105, %s106, %s107
      %p111 = pneg %p105
      %p112 = scmp.eq.s32.totalorder %s17, 1
      %p113 = por %p111, %p112
      %p114 = scmp.ne.s32.totalorder %s106, %s109
      %p115 = scmp.eq.s32.totalorder %s17, 0
      %p116 = por %p114, %p115
      %p117 = scmp.ne.s32.totalorder %s106, %s109
      %p118 = scmp.eq.s32.totalorder %s22, 1
      %p119 = por %p117, %p118
      %p120 = scmp.ne.s32.totalorder %s109, %s110
      %p121 = scmp.eq.s32.totalorder %s22, 0
      %p122 = por %p120, %p121
      %p123 = scmp.ne.s32.totalorder %s109, %s110
      %p124 = scmp.eq.s32.totalorder %s23, 1
      %p125 = por %p123, %p124
      %p127 = scmp.ne.s32.totalorder %s110, %s126
      %p128 = scmp.eq.s32.totalorder %s23, 0
      %p129 = por %p127, %p128
      %p130 = scmp.le.s32.totalorder 1, %s17
      %p131 = scmp.lt.s32.totalorder %s17, 3
      %p132 = pnand %p130, %p131
      %p133 = pneg %p132
      // Predicated region
      $region9: #{tpu_custom_call.1} parent=5 // pred_check
        _
      $region10: #{tpu_custom_call.1} parent=5 // pred_check_branch
        %135 = sbr.rel (%p132) target = $region12
      $region11: #{tpu_custom_call.1} parent=5 // pred_region
        %s136 = ssub.s32 %s17, 1
      $region12: #{tpu_custom_call.1} parent=5 // pred_fallthru
        _
      %p137 = scmp.lt.s32.totalorder %s17, 2
      // Predicated region
      $region13: #{tpu_custom_call.1} parent=5 // pred_check
        %p138 = pneg %p137
      $region14: #{tpu_custom_call.1} parent=5 // pred_check_branch
        %140 = sbr.rel (%p138) target = $region16
      $region15: #{tpu_custom_call.1} parent=5 // pred_region
        // Predicated region
        $region17: #{tpu_custom_call.1} parent=15 // pred_check
          %p141 = pneg %p58
        $region18: #{tpu_custom_call.1} parent=15 // pred_check_branch
          %143 = sbr.rel (%p141) target = $region20
        $region19: #{tpu_custom_call.1} parent=15 // pred_region
          %s144 = sand.u32 %s48, 1
          %s145 = scalar_lea.sflag [#allocation3], %s144
          %s146 = sand.u32 %s48, 1
          %s147 = smul.addr %s146, 8
          %s148 = scalar_lea.vmem [#allocation2], %s147
          %150 = vsyncadd %s145, 0
          %s151 = sadd.s32 %s25, %s24
          %s152 = smul.addr %s151, 8
          %s153 = scalar_lea.hbm %s0, %s152
          %s155 = sshll.u32 %s153, 4
          %s156 = int_to_ptr.hbm [resolvable:$true] %s155
          %s157 = sshll.u32 %s148, 4
          %s158 = int_to_ptr.vmem [resolvable:$true] %s157
          %160 = dma.hbm_to_vmem [thread:$0]  %s156, 128, %s158, %s145
        $region20: #{tpu_custom_call.1} parent=15 // pred_fallthru
          _
        // Predicated region
        $region21: #{tpu_custom_call.1} parent=15 // pred_check
          %p161 = pneg %p86
        $region22: #{tpu_custom_call.1} parent=15 // pred_check_branch
          %163 = sbr.rel (%p161) target = $region24
        $region23: #{tpu_custom_call.1} parent=15 // pred_region
          %s164 = sand.u32 %s76, 1
          %s165 = scalar_lea.sflag [#allocation6], %s164
          %s166 = sand.u32 %s76, 1
          %s167 = smul.addr %s166, 8
          %s168 = scalar_lea.vmem [#allocation5], %s167
          %170 = vsyncadd %s165, 0
          %s171 = sadd.s32 %s26, %s24
          %s172 = smul.addr %s171, 8
          %s173 = scalar_lea.hbm %s1, %s172
          %s175 = sshll.u32 %s173, 4
          %s176 = int_to_ptr.hbm [resolvable:$true] %s175
          %s177 = sshll.u32 %s168, 4
          %s178 = int_to_ptr.vmem [resolvable:$true] %s177
          %180 = dma.hbm_to_vmem [thread:$0]  %s176, 128, %s178, %s165
        $region24: #{tpu_custom_call.1} parent=15 // pred_fallthru
          _
      $region16: #{tpu_custom_call.1} parent=5 // pred_fallthru
        _
      %p181 = scmp.le.s32.totalorder 1, %s17
      %p182 = scmp.lt.s32.totalorder %s17, 3
      %p183 = pnand %p181, %p182
      %p184 = pneg %p183
      // Predicated region
      $region25: #{tpu_custom_call.1} parent=5 // pred_check
        _
      $region26: #{tpu_custom_call.1} parent=5 // pred_check_branch
        %186 = sbr.rel (%p183) target = $region28
      $region27: #{tpu_custom_call.1} parent=5 // pred_region
        %s187 = ssub.s32 %s17, 1
        %s188 = sand.u32 %s51, 1
        %s189 = scalar_lea.sflag [#allocation3], %s188
        %s190 = sand.u32 %s51, 1
        %s191 = smul.addr %s190, 8
        %s192 = scalar_lea.vmem [#allocation2], %s191
        // Predicated region
        $region29: #{tpu_custom_call.1} parent=27 // pred_check
          %p193 = pneg %p64
        $region30: #{tpu_custom_call.1} parent=27 // pred_check_branch
          %195 = sbr.rel (%p193) target = $region32
        $region31: #{tpu_custom_call.1} parent=27 // pred_region
          %197 = dma.done %s189, 128
        $region32: #{tpu_custom_call.1} parent=27 // pred_fallthru
          _
        %s198 = sand.u32 %s79, 1
        %s199 = scalar_lea.sflag [#allocation6], %s198
        %s200 = sand.u32 %s79, 1
        %s201 = smul.addr %s200, 8
        %s202 = scalar_lea.vmem [#allocation5], %s201
        // Predicated region
        $region33: #{tpu_custom_call.1} parent=27 // pred_check
          %p203 = pneg %p92
        $region34: #{tpu_custom_call.1} parent=27 // pred_check_branch
          %205 = sbr.rel (%p203) target = $region36
        $region35: #{tpu_custom_call.1} parent=27 // pred_region
          %207 = dma.done %s199, 128
        $region36: #{tpu_custom_call.1} parent=27 // pred_fallthru
          _
        %s208 = sand.u32 %s51, 1
        %s209 = scalar_lea.sflag [#allocation3], %s208
        %s210 = sand.u32 %s51, 1
        %s211 = smul.addr %s210, 8
        %s212 = scalar_lea.vmem [#allocation2], %s211
        %p213 = pneg %p64
        %p214 = pneg %p61
        %s215 = sand.u32 %s79, 1
        %s216 = scalar_lea.sflag [#allocation6], %s215
        %s217 = sand.u32 %s79, 1
        %s218 = smul.addr %s217, 8
        %s219 = scalar_lea.vmem [#allocation5], %s218
        %p220 = pneg %p92
        %p221 = pneg %p89
        %p222 = pneg %p122
        %p223 = pneg %p119
        %s224 = sand.u32 %s109, 1
        %s225 = scalar_lea.sflag [#allocation4], %s224
        %s226 = sand.u32 %s109, 1
        %s227 = smul.addr %s226, 8
        %s228 = scalar_lea.vmem [#allocation7], %s227
        %v229 = vld [vmem:[%s192] sm:$0xff]
        %v230 = vld [vmem:[%s202] sm:$0xff]
        %vm231 = vcmask 261120
        %v233 = vsel %vm231, %v229, 0
        %v236 = vsel %vm231, %v230, 0
        %238 = vmatpush.xpose.msra.mxu0 0.0
        %239 = vmatpush.xpose.msra.mxu0 0.0
        %240 = vmatpush.xpose.msra.mxu0 0.0
        %241 = vmatpush.xpose.msra.mxu0 0.0
        %242 = vmatpush.xpose.msra.mxu0 0.0
        %243 = vmatpush.xpose.msra.mxu0 0.0
        %244 = vmatpush.xpose.msra.mxu0 0.0
        %245 = vmatpush.xpose.msra.mxu0 0.0
        %246 = vmatpush.xpose.msra.mxu0 0.0
        %247 = vmatpush.xpose.msra.mxu0 0.0
        %248 = vmatpush.xpose.msra.mxu0 0.0
        %249 = vmatpush.xpose.msra.mxu0 0.0
        %250 = vmatpush.xpose.msra.mxu0 0.0
        %251 = vmatpush.xpose.msra.mxu0 0.0
        %252 = vmatpush.xpose.msra.mxu0 0.0
        %253 = vmatpush.xpose.msra.mxu0 %v236
        %254 = vmatmul.f32.gmra.mxu0 %v233
        %v255 = vpop.f32.mrf.mxu0
        %v256 = vadd.f32 0.0, %v255
        %257 = vdwg.mxu0
        %v258 = vmul.f32 %v229, %v229
        %v259 = vsel %vm231, %v258, 0.0
        %260 = vadd.xlane.f32.xlu0 %v259
        %v261 = vpop.xlane.xlu0 %260
        %v262 = vmul.f32 %v230, %v230
        %v264 = vsel %vm231, 1.0, 0
        %v267 = vsel %vm231, %v262, 0
        %269 = vmatpush.xpose.msra.mxu0 0.0
        %270 = vmatpush.xpose.msra.mxu0 0.0
        %271 = vmatpush.xpose.msra.mxu0 0.0
        %272 = vmatpush.xpose.msra.mxu0 0.0
        %273 = vmatpush.xpose.msra.mxu0 0.0
        %274 = vmatpush.xpose.msra.mxu0 0.0
        %275 = vmatpush.xpose.msra.mxu0 0.0
        %276 = vmatpush.xpose.msra.mxu0 0.0
        %277 = vmatpush.xpose.msra.mxu0 0.0
        %278 = vmatpush.xpose.msra.mxu0 0.0
        %279 = vmatpush.xpose.msra.mxu0 0.0
        %280 = vmatpush.xpose.msra.mxu0 0.0
        %281 = vmatpush.xpose.msra.mxu0 0.0
        %282 = vmatpush.xpose.msra.mxu0 0.0
        %283 = vmatpush.xpose.msra.mxu0 0.0
        %284 = vmatpush.xpose.msra.mxu0 %v267
        %285 = vmatmul.f32.gmra.mxu0 %v264
        %v286 = vpop.f32.mrf.mxu0
        %v287 = vadd.f32 0.0, %v286
        %288 = vdwg.mxu0
        %v289 = vmul.f32 %v256, 0.03125
        %v290 = vmul.f32 %v261, -0.015625
        %v291 = vadd.f32 %v289, %v290
        %v292 = vmul.f32 %v287, -0.015625
        %v293 = vperm.slane %v292, 0
        %v294 = vadd.f32 %v291, %v293
        %v295 = vmin.f32 %v294, 0.0
        %v296 = vmul.f32 %v295, 1.442695
        %v297 = vpow.pop %v296
        %vm298 = vcmask 64512
        %299 = vst.msk [vmem:[%s228] sm:$0xff] %vm298, %v297
        %s300 = sand.u32 %s109, 1
        %s301 = scalar_lea.sflag [#allocation4], %s300
        %s302 = sand.u32 %s109, 1
        %s303 = smul.addr %s302, 8
        %s304 = scalar_lea.vmem [#allocation7], %s303
        // Predicated region
        $region37: #{tpu_custom_call.1} parent=27 // pred_check
          %p305 = pneg %p119
        $region38: #{tpu_custom_call.1} parent=27 // pred_check_branch
          %307 = sbr.rel (%p305) target = $region40
        $region39: #{tpu_custom_call.1} parent=27 // pred_region
          %309 = vsyncadd %s301, 0
          %s310 = sadd.s32 %s29, %s28
          %s311 = sadd.s32 %s310, %s27
          %s312 = smul.addr %s311, 8
          %s313 = scalar_lea.hbm %s2, %s312
          %s315 = sshll.u32 %s304, 4
          %s316 = int_to_ptr.vmem [resolvable:$true] %s315
          %s317 = sshll.u32 %s313, 4
          %s318 = int_to_ptr.hbm [resolvable:$true] %s317
          %320 = dma.vmem_to_hbm [thread:$0]  %s316, 128, %s318, %s301
        $region40: #{tpu_custom_call.1} parent=27 // pred_fallthru
          _
      $region28: #{tpu_custom_call.1} parent=5 // pred_fallthru
        _
      %p321 = scmp.le.s32.totalorder 2, %s17
      // Predicated region
      $region41: #{tpu_custom_call.1} parent=5 // pred_check
        %p322 = pneg %p321
      $region42: #{tpu_custom_call.1} parent=5 // pred_check_branch
        %324 = sbr.rel (%p322) target = $region44
      $region43: #{tpu_custom_call.1} parent=5 // pred_region
        %s325 = ssub.s32 %s17, 2
        // Predicated region
        $region45: #{tpu_custom_call.1} parent=43 // pred_check
          %p326 = pneg %p125
        $region46: #{tpu_custom_call.1} parent=43 // pred_check_branch
          %328 = sbr.rel (%p326) target = $region48
        $region47: #{tpu_custom_call.1} parent=43 // pred_region
          %s329 = sand.u32 %s110, 1
          %s330 = scalar_lea.sflag [#allocation4], %s329
          %s331 = sand.u32 %s110, 1
          %s332 = smul.addr %s331, 8
          %s333 = scalar_lea.vmem [#allocation7], %s332
          %335 = dma.done %s330, 128
        $region48: #{tpu_custom_call.1} parent=43 // pred_fallthru
          _
      $region44: #{tpu_custom_call.1} parent=5 // pred_fallthru
        _
    $region6: #{tpu_custom_call.1} parent=1 // loop_footer
      %s21 = sadd.s32 1, %s17
    $region7: #{tpu_custom_call.1} parent=1 // loop_footer_branch
      %16 = sbr.rel target = $region3
    $region8: #{tpu_custom_call.1} parent=1 // loop_exit
      _
    %336 = vsyncpa [#allocation3], 1
    %s337 = scalar_lea.sflag [#allocation3], 1
    %338 = vsyncpa %s337, 1
    %339 = vsyncpa [#allocation6], 1
    %s340 = scalar_lea.sflag [#allocation6], 1
    %341 = vsyncpa %s340, 1
    %342 = vsyncpa [#allocation4], 1
    %s343 = scalar_lea.sflag [#allocation4], 1
    %344 = vsyncpa %s343, 1

</llo_original>
